<compile_context>
chip_gen: v7x
topology: tpu7x:2x2x1
jax: 0.10.0
libtpu: 0.0.40
codegen_flags: <defaults>
</compile_context>

<pallas_src>
import functools

import jax
import jax.numpy as jnp
from jax.experimental import pallas as pl
from jax.experimental.pallas import tpu as pltpu


# ----------------------------------------------------------------------------
# Device introspection: only enable the 2-way "parallel" chunk axis when the
# chip actually has >= 2 TensorCores (v7x / megacore).
# ----------------------------------------------------------------------------
@functools.lru_cache(maxsize=None)
def _tensorcores_per_device():
    try:
        info = pltpu.get_tpu_info()
        for name in ("num_cores", "core_count", "num_tensorcores",
                     "tensor_core_count"):
            v = getattr(info, name, None)
            if isinstance(v, int) and v >= 1:
                return int(v)
    except Exception:
        pass
    try:
        kind = jax.devices()[0].device_kind.lower()
        if ("v4" in kind) or ("v5p" in kind) or ("v7" in kind) or ("7x" in kind):
            return 2
    except Exception:
        pass
    return 1


def _bce_elem(x, y):
    # numerically-stable BCEWithLogits: max(x,0) - x*y + log(1 + exp(-|x|))
    return jnp.maximum(x, 0.0) - x * y + jnp.log(1.0 + jnp.exp(-jnp.abs(x)))


# ----------------------------------------------------------------------------
# Pallas kernel 1: tiled, lane-dense BCE-with-logits sum (objectness).
# ----------------------------------------------------------------------------
def _bce_sum_kernel(x_ref, y_ref, o_ref, acc_ref, *, rows, tile_rows,
                    tiles_per_chunk, apply_mask):
    # grid = (chunks, tiles_per_chunk); axis 1 is the reduction axis.
    c = pl.program_id(0)
    r = pl.program_id(1)

    @pl.when(r == 0)
    def _init():
        acc_ref[...] = jnp.zeros_like(acc_ref)

    bce = _bce_elem(x_ref[...], y_ref[...])                 # (tile_rows, lane)
    if apply_mask:
        # mask rows past the (static) end of the array in the last tile
        row0 = (c * tiles_per_chunk + r) * tile_rows
        ridx = row0 + jax.lax.broadcasted_iota(jnp.int32, bce.shape, 0)
        bce = jnp.where(ridx < rows, bce, 0.0)

    # fold each tile to 8 sublanes before accumulating -> 16x less accumulator
    # load/store traffic; pure VPU adds (layout-trivial sublane-group reshape).
    acc_ref[...] += bce.reshape(tile_rows // 8, 8, bce.shape[1]).sum(axis=0)

    @pl.when(r == pl.num_programs(1) - 1)
    def _finalize():
        o_ref[...] = acc_ref[...]


def _bce_sum_pallas_2d(x2d, y2d, *, max_tile_rows=256):
    rows, lane = x2d.shape
    tile_rows = max(8, min(max_tile_rows, (rows // 8) * 8))
    n_tiles = pl.cdiv(rows, tile_rows)
    n_chunks = 2 if (_tensorcores_per_device() >= 2
                     and n_tiles >= 2 and n_tiles % 2 == 0) else 1
    tiles_per_chunk = n_tiles // n_chunks
    apply_mask = (rows % tile_rows) != 0

    kernel = functools.partial(
        _bce_sum_kernel, rows=rows, tile_rows=tile_rows,
        tiles_per_chunk=tiles_per_chunk, apply_mask=apply_mask)

    partial_sums = pl.pallas_call(
        kernel,
        out_shape=jax.ShapeDtypeStruct((n_chunks * 8, lane), jnp.float32),
        grid=(n_chunks, tiles_per_chunk),
        in_specs=[
            pl.BlockSpec((tile_rows, lane),
                         lambda c, r: (c * tiles_per_chunk + r, 0)),
            pl.BlockSpec((tile_rows, lane),
                         lambda c, r: (c * tiles_per_chunk + r, 0)),
        ],
        out_specs=pl.BlockSpec((8, lane), lambda c, r: (c, 0)),
        scratch_shapes=[pltpu.VMEM((8, lane), jnp.float32)],
        compiler_params=pltpu.CompilerParams(
            dimension_semantics=("parallel", "arbitrary")),
    )(x2d, y2d)
    return jnp.sum(partial_sums)


def bce_with_logits_sum(logits, targets, *, max_tile_rows=256):
    """Sum of elementwise BCE-with-logits over arbitrarily shaped inputs."""
    x = logits.reshape(-1).astype(jnp.float32)
    y = targets.reshape(-1).astype(jnp.float32)
    m = x.shape[0]

    if m >= 65536:
        lane = 1024
    elif m >= 8192:
        lane = 512
    else:
        lane = 128
    rows = m // lane

    total = jnp.float32(0.0)
    m_bulk = 0
    if rows >= 8:
        m_bulk = rows * lane
        # TODO(synk): a fully copy-free path would feed the native (B,3,H,W)
        # blocks directly; the 2D reshape here may still cost one small copy.
        total = total + _bce_sum_pallas_2d(
            x[:m_bulk].reshape(rows, lane),
            y[:m_bulk].reshape(rows, lane),
            max_tile_rows=max_tile_rows)
    if m_bulk < m:
        # ragged tail (< 8*lane elements): plain jnp, negligible.
        total = total + jnp.sum(_bce_elem(x[m_bulk:], y[m_bulk:]))
    return total


# ----------------------------------------------------------------------------
# Pallas kernel 2: matched-target box decode + GIoU + masked loss sums.
# Features are packed as (n_feat, 8, L) so every op runs on full (8,lane) tiles.
# ----------------------------------------------------------------------------
def _make_matched_kernel(num_classes):
    nc = num_classes
    feat = 5 + nc

    def kernel(p_ref, giou_ref, box_ref, cls_ref):
        @pl.when(pl.program_id(0) == 0)
        def _init():
            box_ref[...] = jnp.zeros_like(box_ref)
            cls_ref[...] = jnp.zeros_like(cls_ref)

        def sigmoid(v):                       # exact (per correctness review)
            return 1.0 / (1.0 + jnp.exp(-v))

        anc_w = p_ref[feat + 0]               # each slice: (8, block_l)
        anc_h = p_ref[feat + 1]
        b_cx = p_ref[feat + 2]
        b_cy = p_ref[feat + 3]
        b_w = p_ref[feat + 4]
        b_h = p_ref[feat + 5]
        cls_id = p_ref[feat + 6]
        valid = p_ref[feat + 7]

        a_cx = sigmoid(p_ref[0]) * 2.0 - 0.5
        a_cy = sigmoid(p_ref[1]) * 2.0 - 0.5
        a_w = (sigmoid(p_ref[2]) * 2.0) ** 2 * anc_w
        a_h = (sigmoid(p_ref[3]) * 2.0) ** 2 * anc_h

        a_xmin, a_xmax = a_cx - a_w * 0.5, a_cx + a_w * 0.5
        a_ymin, a_ymax = a_cy - a_h * 0.5, a_cy + a_h * 0.5
        b_xmin, b_xmax = b_cx - b_w * 0.5, b_cx + b_w * 0.5
        b_ymin, b_ymax = b_cy - b_h * 0.5, b_cy + b_h * 0.5

        inter_w = jnp.maximum(
            jnp.minimum(a_xmax, b_xmax) - jnp.maximum(a_xmin, b_xmin), 0.0)
        inter_h = jnp.maximum(
            jnp.minimum(a_ymax, b_ymax) - jnp.maximum(a_ymin, b_ymin), 0.0)
        inter = inter_w * inter_h

        union = a_w * a_h + b_w * b_h - inter             # torch: no eps here
        iou = inter / union
        convex_w = (jnp.maximum(a_xmax, b_xmax)
                    - jnp.minimum(a_xmin, b_xmin) + 1e-16)
        convex_h = jnp.maximum(a_ymax, b_ymax) - jnp.minimum(a_ymin, b_ymin)
        convex_area = convex_w * convex_h + 1e-16
        gious = iou - (convex_area - union) / convex_area  # (8, block_l)
        giou_ref[...] = gious

        is_valid = valid > 0.0
        # masked sums; where() keeps NaNs from padded (zero-anchor) lanes out.
        box_ref[...] += jnp.sum(jnp.where(is_valid, 1.0 - gious, 0.0),
                                keepdims=True)

        if nc > 1:
            bce = jnp.zeros_like(gious)
            for c in range(nc):
                logit = p_ref[5 + c]
                tgt = (cls_id == float(c)).astype(jnp.float32)
                bce = bce + (jnp.maximum(logit, 0.0) - logit * tgt
                             + jnp.log(1.0 + jnp.exp(-jnp.abs(logit))))
            cls_ref[...] += jnp.sum(jnp.where(is_valid, bce, 0.0),
                                    keepdims=True)

    return kernel


def matched_losses(packed, num_classes):
    n_feat, sub, L = packed.shape
    if L <= 1024:
        block_l = L
    else:
        block_l = next(b for b in (1024, 512, 256, 128) if L % b == 0)
    n_blocks = L // block_l

    giou, box_p, cls_p = pl.pallas_call(
        _make_matched_kernel(num_classes),
        out_shape=(jax.ShapeDtypeStruct((sub, L), jnp.float32),
                   jax.ShapeDtypeStruct((8, 128), jnp.float32),
                   jax.ShapeDtypeStruct((8, 128), jnp.float32)),
        grid=(n_blocks,),
        in_specs=[pl.BlockSpec((n_feat, sub, block_l), lambda b: (0, 0, b))],
        out_specs=(pl.BlockSpec((sub, block_l), lambda b: (0, b)),
                   pl.BlockSpec((8, 128), lambda b: (0, 0)),
                   pl.BlockSpec((8, 128), lambda b: (0, 0))),
        compiler_params=pltpu.CompilerParams(
            dimension_semantics=("arbitrary",)),
    )(packed)
    return giou.reshape(-1), box_p[0, 0], cls_p[0, 0]


# ----------------------------------------------------------------------------
# Per-layer loss (JAX glue around the two Pallas kernels).
# ----------------------------------------------------------------------------
def layer_losses(layer, targets, layer_anchors, num_classes, gap_threshold=4.0):
    batch = layer.shape[0]
    height, width = layer.shape[-2], layer.shape[-1]
    nc = num_classes
    feat = 5 + nc
    # Native layout only — the fully transposed feature map is never built.
    lay5 = layer.reshape(batch, 3, feat, height, width)

    n_tgt = targets.shape[0]
    gain = jnp.array([1.0, 1.0, width, height, width, height], jnp.float32)
    t = targets * gain                                            # (N, 6)

    wh_ratio = t[None, :, 4:6] / layer_anchors[:, None, :]        # (3, N, 2)
    max_ratio = jnp.maximum(wh_ratio, 1.0 / wh_ratio).max(axis=2)
    sel = (max_ratio < gap_threshold).reshape(-1)                 # (3N,)

    cand_t = jnp.tile(t, (3, 1))                                  # (3N, 6)
    cand_anchor = jnp.repeat(jnp.arange(3, dtype=jnp.int32), n_tgt)

    xy = cand_t[:, 2:4]
    rem = jnp.mod(xy, 1.0)
    less_x = (rem[:, 0] < 0.5) & (xy[:, 0] > 1.0)
    less_y = (rem[:, 1] < 0.5) & (xy[:, 1] > 1.0)
    greater_x = (rem[:, 0] > 0.5) & (xy[:, 0] < (width - 1.0))
    greater_y = (rem[:, 1] > 0.5) & (xy[:, 1] < (height - 1.0))

    blocks = [
        (jnp.array([0.0, 0.0], jnp.float32), sel),
        (jnp.array([0.5, 0.0], jnp.float32), sel & less_x),
        (jnp.array([0.0, 0.5], jnp.float32), sel & less_y),
        (jnp.array([-0.5, 0.0], jnp.float32), sel & greater_x),
        (jnp.array([0.0, -0.5], jnp.float32), sel & greater_y),
    ]
    ext_t = jnp.concatenate([cand_t] * 5, axis=0)                 # (15N, 6)
    ext_anchor = jnp.concatenate([cand_anchor] * 5, axis=0)
    ext_off = jnp.concatenate(
        [jnp.broadcast_to(o, xy.shape) for o, _ in blocks], axis=0)
    ext_valid = jnp.concatenate([v for _, v in blocks], axis=0)   # (15N,)

    gt_img = ext_t[:, 0].astype(jnp.int32)
    gt_cls = ext_t[:, 1]
    gt_xy = ext_t[:, 2:4]
    gt_wh = ext_t[:, 4:6]
    grid_xy = jnp.floor(gt_xy - ext_off).astype(jnp.int32)
    gx, gy = grid_xy[:, 0], grid_xy[:, 1]
    gt_xy_rel = gt_xy - grid_xy.astype(jnp.float32)
    sel_anchors = layer_anchors[ext_anchor]                       # (15N, 2)

    # Gather raw predictions for matched cells straight from the native layout.
    # TODO(synk): move this gather into the matched-loss kernel (scalar-prefetch
    # the cell indices + per-row DMA) so it costs O(K*feat) HBM bytes.
    pred = lay5[gt_img, ext_anchor, :, gy, gx].astype(jnp.float32)  # (15N, feat)

    k = pred.shape[0]
    sub = 8
    lane_groups = -(-k // (sub * 128)) if k > 0 else 0
    L = max(128, lane_groups * 128)
    k_pad = sub * L
    valid_f = ext_valid.astype(jnp.float32)

    packed2d = jnp.concatenate([
        pred.T,                                   # 0..feat-1      : raw logits
        sel_anchors.astype(jnp.float32).T,        # feat+0..feat+1 : anchors
        gt_xy_rel.astype(jnp.float32).T,          # feat+2..feat+3 : gt xy (cell rel.)
        gt_wh.astype(jnp.float32).T,              # feat+4..feat+5 : gt wh
        gt_cls.astype(jnp.float32)[None, :],      # feat+6         : class id
        valid_f[None, :],                         # feat+7         : validity
    ], axis=0)                                    # (feat+8, 15N) — tiny
    packed = jnp.pad(packed2d, ((0, 0), (0, k_pad - k))).reshape(feat + 8, sub, L)

    gious_flat, box_sum, cls_sum = matched_losses(packed, nc)
    gious = gious_flat[:k]

    count = jnp.sum(valid_f)
    loss_box = jnp.where(count > 0, box_sum / jnp.maximum(count, 1.0), 0.0)
    if nc > 1:
        loss_cls = jnp.where(count > 0, cls_sum / jnp.maximum(count * nc, 1.0), 0.0)
    else:
        loss_cls = jnp.float32(0.0)

    # Scatter clamped GIoU into objectness ground truth (invalid rows dropped).
    # TODO(synk): torch assigns duplicate indices sequentially; XLA scatter order
    # among duplicates is unspecified (only matters if two matches hit one cell).
    obj_gt = jnp.zeros((batch, 3, height, width), jnp.float32)
    img_s = jnp.where(ext_valid, gt_img, batch)                   # OOB for padding
    obj_gt = obj_gt.at[img_s, ext_anchor, gy, gx].set(
        jnp.maximum(gious, 0.0), mode='drop')

    obj_logits = lay5[:, :, 4]                    # contiguous 1/feat channel slice
    obj_sum = bce_with_logits_sum(obj_logits, obj_gt)
    loss_obj = obj_sum / jnp.float32(batch * 3 * height * width)
    return loss_box, loss_obj, loss_cls


def yolo_head_forward(predict, targets, anchors, num_classes):
    balance = [4.0, 1.0, 0.4]
    loss_box = jnp.float32(0.0)
    loss_obj = jnp.float32(0.0)
    loss_cls = jnp.float32(0.0)
    for i, layer in enumerate(predict):
        lb, lo, lc = layer_losses(layer, targets, anchors[i], num_classes)
        loss_box = loss_box + lb
        loss_obj = loss_obj + lo * balance[i]
        loss_cls = loss_cls + lc

    num_predict = len(predict)
    scale = 3.0 / num_predict
    batch_size = predict[0].shape[0]
    loss_box = loss_box * 0.05 * scale
    loss_obj = loss_obj * 1.0 * scale * (1.4 if num_predict == 4 else 1.0)
    loss_cls = loss_cls * (0.5 * num_classes / 80.0) * scale
    loss = loss_box + loss_obj + loss_cls
    return loss * batch_size, (loss_box, loss_obj, loss_cls, loss)


if __name__ == "__main__":
    key = jax.random.PRNGKey(0)
    keys = jax.random.split(key, 8)

    num_classes = 4
    B = 2
    strides = [8, 16, 32]
    sizes = [(16, 16), (8, 8), (4, 4)]

    anchors_px = jnp.array([[[10., 13.], [16., 30.], [33., 23.]],
                            [[30., 61.], [62., 45.], [59., 119.]],
                            [[116., 90.], [156., 198.], [373., 326.]]], jnp.float32)
    anchors = anchors_px / jnp.array(strides, jnp.float32)[:, None, None]

    predict = []
    for i, (H, W) in enumerate(sizes):
        predict.append(0.5 * jax.random.normal(
            keys[i], (B, 3 * (5 + num_classes), H, W), jnp.float32))

    N = 6
    img_id = jax.random.randint(keys[3], (N,), 0, B).astype(jnp.float32)
    cls_id = jax.random.randint(keys[4], (N,), 0, num_classes).astype(jnp.float32)
    cxcy = jax.random.uniform(keys[5], (N, 2), minval=0.1, maxval=0.9)
    wh = jax.random.uniform(keys[6], (N, 2), minval=0.05, maxval=0.5)
    targets = jnp.concatenate(
        [img_id[:, None], cls_id[:, None], cxcy, wh], axis=1).astype(jnp.float32)

    fwd = jax.jit(functools.partial(yolo_head_forward, num_classes=num_classes))
    loss, parts = fwd(predict, targets, anchors)
    jax.block_until_ready(loss)
    print("KERNEL_OK")
</pallas_src>

<mosaic_0001>
module attributes {stable_mosaic.version = 11 : i64} {
  func.func @kernel(%arg0: i32, %arg1: memref<17x8x128xf32, #tpu.memory_space<vmem>>, %arg2: memref<8x128xf32, #tpu.memory_space<vmem>>, %arg3: memref<8x128xf32, #tpu.memory_space<vmem>>, %arg4: memref<8x128xf32, #tpu.memory_space<vmem>>) attributes {dimension_semantics = [#tpu.dimension_semantics<arbitrary>], iteration_bounds = array<i64: 1>, scalar_prefetch = 0 : i64, scratch_operands = 0 : i64, tpu.core_type = #tpu.core_type<tc>, window_params = [{transform_indices = @transform_0, window_bounds = array<i64: 17, 8, 128>}, {transform_indices = @transform_1, window_bounds = array<i64: 8, 128>}, {pipeline_mode = #tpu.pipeline_mode<synchronous>, transform_indices = @transform_2, window_bounds = array<i64: 8, 128>}, {pipeline_mode = #tpu.pipeline_mode<synchronous>, transform_indices = @transform_3, window_bounds = array<i64: 8, 128>}]} {
    %c0_i32 = arith.constant 0 : i32
    %0 = arith.cmpi eq, %arg0, %c0_i32 : i32
    %1 = arith.extui %0 : i1 to i32
    %c0_i32_0 = arith.constant 0 : i32
    %2 = arith.cmpi ne, %1, %c0_i32_0 : i32
    scf.if %2 {
      %cst_95 = arith.constant 0.000000e+00 : f32
      %229 = vector.broadcast %cst_95 : f32 to vector<8x128xf32>
      %c0_96 = arith.constant 0 : index
      %c0_97 = arith.constant 0 : index
      %230 = vector.load %arg3[%c0_96, %c0_97] : memref<8x128xf32, #tpu.memory_space<vmem>>, vector<8x128xf32>
      tpu.vector_store %arg3[%c0_96, %c0_97], %229 {strides = array<i32>} : memref<8x128xf32, #tpu.memory_space<vmem>>, vector<8x128xf32>,
      %cst_98 = arith.constant 0.000000e+00 : f32
      %231 = vector.broadcast %cst_98 : f32 to vector<8x128xf32>
      %c0_99 = arith.constant 0 : index
      %c0_100 = arith.constant 0 : index
      %232 = vector.load %arg4[%c0_99, %c0_100] : memref<8x128xf32, #tpu.memory_space<vmem>>, vector<8x128xf32>
      tpu.vector_store %arg4[%c0_99, %c0_100], %231 {strides = array<i32>} : memref<8x128xf32, #tpu.memory_space<vmem>>, vector<8x128xf32>,
    } else {
    }
    %c9 = arith.constant 9 : index
    %c0 = arith.constant 0 : index
    %c0_1 = arith.constant 0 : index
    %3 = vector.load %arg1[%c9, %c0, %c0_1] : memref<17x8x128xf32, #tpu.memory_space<vmem>>, vector<1x8x128xf32>
    %4 = vector.shape_cast %3 : vector<1x8x128xf32> to vector<8x128xf32>
    %c10 = arith.constant 10 : index
    %c0_2 = arith.constant 0 : index
    %c0_3 = arith.constant 0 : index
    %5 = vector.load %arg1[%c10, %c0_2, %c0_3] : memref<17x8x128xf32, #tpu.memory_space<vmem>>, vector<1x8x128xf32>
    %6 = vector.shape_cast %5 : vector<1x8x128xf32> to vector<8x128xf32>
    %c11 = arith.constant 11 : index
    %c0_4 = arith.constant 0 : index
    %c0_5 = arith.constant 0 : index
    %7 = vector.load %arg1[%c11, %c0_4, %c0_5] : memref<17x8x128xf32, #tpu.memory_space<vmem>>, vector<1x8x128xf32>
    %8 = vector.shape_cast %7 : vector<1x8x128xf32> to vector<8x128xf32>
    %c12 = arith.constant 12 : index
    %c0_6 = arith.constant 0 : index
    %c0_7 = arith.constant 0 : index
    %9 = vector.load %arg1[%c12, %c0_6, %c0_7] : memref<17x8x128xf32, #tpu.memory_space<vmem>>, vector<1x8x128xf32>
    %10 = vector.shape_cast %9 : vector<1x8x128xf32> to vector<8x128xf32>
    %c13 = arith.constant 13 : index
    %c0_8 = arith.constant 0 : index
    %c0_9 = arith.constant 0 : index
    %11 = vector.load %arg1[%c13, %c0_8, %c0_9] : memref<17x8x128xf32, #tpu.memory_space<vmem>>, vector<1x8x128xf32>
    %12 = vector.shape_cast %11 : vector<1x8x128xf32> to vector<8x128xf32>
    %c14 = arith.constant 14 : index
    %c0_10 = arith.constant 0 : index
    %c0_11 = arith.constant 0 : index
    %13 = vector.load %arg1[%c14, %c0_10, %c0_11] : memref<17x8x128xf32, #tpu.memory_space<vmem>>, vector<1x8x128xf32>
    %14 = vector.shape_cast %13 : vector<1x8x128xf32> to vector<8x128xf32>
    %c15 = arith.constant 15 : index
    %c0_12 = arith.constant 0 : index
    %c0_13 = arith.constant 0 : index
    %15 = vector.load %arg1[%c15, %c0_12, %c0_13] : memref<17x8x128xf32, #tpu.memory_space<vmem>>, vector<1x8x128xf32>
    %16 = vector.shape_cast %15 : vector<1x8x128xf32> to vector<8x128xf32>
    %c16 = arith.constant 16 : index
    %c0_14 = arith.constant 0 : index
    %c0_15 = arith.constant 0 : index
    %17 = vector.load %arg1[%c16, %c0_14, %c0_15] : memref<17x8x128xf32, #tpu.memory_space<vmem>>, vector<1x8x128xf32>
    %18 = vector.shape_cast %17 : vector<1x8x128xf32> to vector<8x128xf32>
    %c0_16 = arith.constant 0 : index
    %c0_17 = arith.constant 0 : index
    %c0_18 = arith.constant 0 : index
    %19 = vector.load %arg1[%c0_16, %c0_17, %c0_18] : memref<17x8x128xf32, #tpu.memory_space<vmem>>, vector<1x8x128xf32>
    %20 = vector.shape_cast %19 : vector<1x8x128xf32> to vector<8x128xf32>
    %cst = arith.constant 0.000000e+00 : f32
    %21 = vector.broadcast %cst : f32 to vector<8x128xf32>
    %22 = arith.subf %21, %20 : vector<8x128xf32>
    %23 = math.exp %22 : vector<8x128xf32>
    %cst_19 = arith.constant 1.000000e+00 : f32
    %24 = vector.broadcast %cst_19 : f32 to vector<8x128xf32>
    %25 = arith.addf %24, %23 : vector<8x128xf32>
    %cst_20 = arith.constant 1.000000e+00 : f32
    %26 = vector.broadcast %cst_20 : f32 to vector<8x128xf32>
    %27 = arith.divf %26, %25 : vector<8x128xf32>
    %cst_21 = arith.constant 2.000000e+00 : f32
    %28 = vector.broadcast %cst_21 : f32 to vector<8x128xf32>
    %29 = arith.mulf %27, %28 : vector<8x128xf32>
    %cst_22 = arith.constant 5.000000e-01 : f32
    %30 = vector.broadcast %cst_22 : f32 to vector<8x128xf32>
    %31 = arith.subf %29, %30 : vector<8x128xf32>
    %c1 = arith.constant 1 : index
    %c0_23 = arith.constant 0 : index
    %c0_24 = arith.constant 0 : index
    %32 = vector.load %arg1[%c1, %c0_23, %c0_24] : memref<17x8x128xf32, #tpu.memory_space<vmem>>, vector<1x8x128xf32>
    %33 = vector.shape_cast %32 : vector<1x8x128xf32> to vector<8x128xf32>
    %cst_25 = arith.constant 0.000000e+00 : f32
    %34 = vector.broadcast %cst_25 : f32 to vector<8x128xf32>
    %35 = arith.subf %34, %33 : vector<8x128xf32>
    %36 = math.exp %35 : vector<8x128xf32>
    %cst_26 = arith.constant 1.000000e+00 : f32
    %37 = vector.broadcast %cst_26 : f32 to vector<8x128xf32>
    %38 = arith.addf %37, %36 : vector<8x128xf32>
    %cst_27 = arith.constant 1.000000e+00 : f32
    %39 = vector.broadcast %cst_27 : f32 to vector<8x128xf32>
    %40 = arith.divf %39, %38 : vector<8x128xf32>
    %cst_28 = arith.constant 2.000000e+00 : f32
    %41 = vector.broadcast %cst_28 : f32 to vector<8x128xf32>
    %42 = arith.mulf %40, %41 : vector<8x128xf32>
    %cst_29 = arith.constant 5.000000e-01 : f32
    %43 = vector.broadcast %cst_29 : f32 to vector<8x128xf32>
    %44 = arith.subf %42, %43 : vector<8x128xf32>
    %c2 = arith.constant 2 : index
    %c0_30 = arith.constant 0 : index
    %c0_31 = arith.constant 0 : index
    %45 = vector.load %arg1[%c2, %c0_30, %c0_31] : memref<17x8x128xf32, #tpu.memory_space<vmem>>, vector<1x8x128xf32>
    %46 = vector.shape_cast %45 : vector<1x8x128xf32> to vector<8x128xf32>
    %cst_32 = arith.constant 0.000000e+00 : f32
    %47 = vector.broadcast %cst_32 : f32 to vector<8x128xf32>
    %48 = arith.subf %47, %46 : vector<8x128xf32>
    %49 = math.exp %48 : vector<8x128xf32>
    %cst_33 = arith.constant 1.000000e+00 : f32
    %50 = vector.broadcast %cst_33 : f32 to vector<8x128xf32>
    %51 = arith.addf %50, %49 : vector<8x128xf32>
    %cst_34 = arith.constant 1.000000e+00 : f32
    %52 = vector.broadcast %cst_34 : f32 to vector<8x128xf32>
    %53 = arith.divf %52, %51 : vector<8x128xf32>
    %cst_35 = arith.constant 2.000000e+00 : f32
    %54 = vector.broadcast %cst_35 : f32 to vector<8x128xf32>
    %55 = arith.mulf %53, %54 : vector<8x128xf32>
    %56 = arith.mulf %55, %55 : vector<8x128xf32>
    %57 = arith.mulf %56, %4 : vector<8x128xf32>
    %c3 = arith.constant 3 : index
    %c0_36 = arith.constant 0 : index
    %c0_37 = arith.constant 0 : index
    %58 = vector.load %arg1[%c3, %c0_36, %c0_37] : memref<17x8x128xf32, #tpu.memory_space<vmem>>, vector<1x8x128xf32>
    %59 = vector.shape_cast %58 : vector<1x8x128xf32> to vector<8x128xf32>
    %cst_38 = arith.constant 0.000000e+00 : f32
    %60 = vector.broadcast %cst_38 : f32 to vector<8x128xf32>
    %61 = arith.subf %60, %59 : vector<8x128xf32>
    %62 = math.exp %61 : vector<8x128xf32>
    %cst_39 = arith.constant 1.000000e+00 : f32
    %63 = vector.broadcast %cst_39 : f32 to vector<8x128xf32>
    %64 = arith.addf %63, %62 : vector<8x128xf32>
    %cst_40 = arith.constant 1.000000e+00 : f32
    %65 = vector.broadcast %cst_40 : f32 to vector<8x128xf32>
    %66 = arith.divf %65, %64 : vector<8x128xf32>
    %cst_41 = arith.constant 2.000000e+00 : f32
    %67 = vector.broadcast %cst_41 : f32 to vector<8x128xf32>
    %68 = arith.mulf %66, %67 : vector<8x128xf32>
    %69 = arith.mulf %68, %68 : vector<8x128xf32>
    %70 = arith.mulf %69, %6 : vector<8x128xf32>
    %cst_42 = arith.constant 5.000000e-01 : f32
    %71 = vector.broadcast %cst_42 : f32 to vector<8x128xf32>
    %72 = arith.mulf %57, %71 : vector<8x128xf32>
    %73 = arith.subf %31, %72 : vector<8x128xf32>
    %cst_43 = arith.constant 5.000000e-01 : f32
    %74 = vector.broadcast %cst_43 : f32 to vector<8x128xf32>
    %75 = arith.mulf %57, %74 : vector<8x128xf32>
    %76 = arith.addf %31, %75 : vector<8x128xf32>
    %cst_44 = arith.constant 5.000000e-01 : f32
    %77 = vector.broadcast %cst_44 : f32 to vector<8x128xf32>
    %78 = arith.mulf %70, %77 : vector<8x128xf32>
    %79 = arith.subf %44, %78 : vector<8x128xf32>
    %cst_45 = arith.constant 5.000000e-01 : f32
    %80 = vector.broadcast %cst_45 : f32 to vector<8x128xf32>
    %81 = arith.mulf %70, %80 : vector<8x128xf32>
    %82 = arith.addf %44, %81 : vector<8x128xf32>
    %cst_46 = arith.constant 5.000000e-01 : f32
    %83 = vector.broadcast %cst_46 : f32 to vector<8x128xf32>
    %84 = arith.mulf %12, %83 : vector<8x128xf32>
    %85 = arith.subf %8, %84 : vector<8x128xf32>
    %cst_47 = arith.constant 5.000000e-01 : f32
    %86 = vector.broadcast %cst_47 : f32 to vector<8x128xf32>
    %87 = arith.mulf %12, %86 : vector<8x128xf32>
    %88 = arith.addf %8, %87 : vector<8x128xf32>
    %cst_48 = arith.constant 5.000000e-01 : f32
    %89 = vector.broadcast %cst_48 : f32 to vector<8x128xf32>
    %90 = arith.mulf %14, %89 : vector<8x128xf32>
    %91 = arith.subf %10, %90 : vector<8x128xf32>
    %cst_49 = arith.constant 5.000000e-01 : f32
    %92 = vector.broadcast %cst_49 : f32 to vector<8x128xf32>
    %93 = arith.mulf %14, %92 : vector<8x128xf32>
    %94 = arith.addf %10, %93 : vector<8x128xf32>
    %95 = arith.minimumf %76, %88 : vector<8x128xf32>
    %96 = arith.maximumf %73, %85 : vector<8x128xf32>
    %97 = arith.subf %95, %96 : vector<8x128xf32>
    %cst_50 = arith.constant 0.000000e+00 : f32
    %98 = vector.broadcast %cst_50 : f32 to vector<8x128xf32>
    %99 = arith.maximumf %97, %98 : vector<8x128xf32>
    %100 = arith.minimumf %82, %94 : vector<8x128xf32>
    %101 = arith.maximumf %79, %91 : vector<8x128xf32>
    %102 = arith.subf %100, %101 : vector<8x128xf32>
    %cst_51 = arith.constant 0.000000e+00 : f32
    %103 = vector.broadcast %cst_51 : f32 to vector<8x128xf32>
    %104 = arith.maximumf %102, %103 : vector<8x128xf32>
    %105 = arith.mulf %99, %104 : vector<8x128xf32>
    %106 = arith.mulf %57, %70 : vector<8x128xf32>
    %107 = arith.mulf %12, %14 : vector<8x128xf32>
    %108 = arith.addf %106, %107 : vector<8x128xf32>
    %109 = arith.subf %108, %105 : vector<8x128xf32>
    %110 = arith.divf %105, %109 : vector<8x128xf32>
    %111 = arith.maximumf %76, %88 : vector<8x128xf32>
    %112 = arith.minimumf %73, %85 : vector<8x128xf32>
    %113 = arith.subf %111, %112 : vector<8x128xf32>
    %cst_52 = arith.constant 1.000000e-16 : f32
    %114 = vector.broadcast %cst_52 : f32 to vector<8x128xf32>
    %115 = arith.addf %113, %114 : vector<8x128xf32>
    %116 = arith.maximumf %82, %94 : vector<8x128xf32>
    %117 = arith.minimumf %79, %91 : vector<8x128xf32>
    %118 = arith.subf %116, %117 : vector<8x128xf32>
    %119 = arith.mulf %115, %118 : vector<8x128xf32>
    %cst_53 = arith.constant 1.000000e-16 : f32
    %120 = vector.broadcast %cst_53 : f32 to vector<8x128xf32>
    %121 = arith.addf %119, %120 : vector<8x128xf32>
    %122 = arith.subf %121, %109 : vector<8x128xf32>
    %123 = arith.divf %122, %121 : vector<8x128xf32>
    %124 = arith.subf %110, %123 : vector<8x128xf32>
    %c0_54 = arith.constant 0 : index
    %c0_55 = arith.constant 0 : index
    %125 = vector.load %arg2[%c0_54, %c0_55] : memref<8x128xf32, #tpu.memory_space<vmem>>, vector<8x128xf32>
    tpu.vector_store %arg2[%c0_54, %c0_55], %124 {strides = array<i32>} : memref<8x128xf32, #tpu.memory_space<vmem>>, vector<8x128xf32>,
    %cst_56 = arith.constant 0.000000e+00 : f32
    %126 = vector.broadcast %cst_56 : f32 to vector<8x128xf32>
    %127 = arith.cmpf ogt, %18, %126 : vector<8x128xf32>
    %c0_57 = arith.constant 0 : index
    %c0_58 = arith.constant 0 : index
    %128 = vector.load %arg3[%c0_57, %c0_58] : memref<8x128xf32, #tpu.memory_space<vmem>>, vector<8x128xf32>
    %cst_59 = arith.constant 1.000000e+00 : f32
    %129 = vector.broadcast %cst_59 : f32 to vector<8x128xf32>
    %130 = arith.subf %129, %124 : vector<8x128xf32>
    %cst_60 = arith.constant 0.000000e+00 : f32
    %131 = vector.broadcast %cst_60 : f32 to vector<8x128xf32>
    %132 = arith.select %127, %130, %131 : vector<8x128xi1>, vector<8x128xf32>
    %133 = vector.shape_cast %132 : vector<8x128xf32> to vector<1x8x128xf32>
    %cst_61 = arith.constant dense<0.000000e+00> : vector<1xf32>
    %134 = vector.multi_reduction <add>, %133, %cst_61 [1, 2] : vector<1x8x128xf32> to vector<1xf32>
    %135 = vector.shape_cast %134 : vector<1xf32> to vector<1x1x1xf32>
    %136 = vector.extract %135[0, 0, 0] : f32 from vector<1x1x1xf32>
    %137 = vector.broadcast %136 : f32 to vector<1x1xf32>
    %138 = vector.broadcast %137 : vector<1x1xf32> to vector<8x128xf32>
    %139 = arith.addf %128, %138 : vector<8x128xf32>
    %c0_62 = arith.constant 0 : index
    %c0_63 = arith.constant 0 : index
    %140 = vector.load %arg3[%c0_62, %c0_63] : memref<8x128xf32, #tpu.memory_space<vmem>>, vector<8x128xf32>
    tpu.vector_store %arg3[%c0_62, %c0_63], %139 {strides = array<i32>} : memref<8x128xf32, #tpu.memory_space<vmem>>, vector<8x128xf32>,
    %cst_64 = arith.constant 0.000000e+00 : f32
    %141 = vector.broadcast %cst_64 : f32 to vector<8x128xf32>
    %c5 = arith.constant 5 : index
    %c0_65 = arith.constant 0 : index
    %c0_66 = arith.constant 0 : index
    %142 = vector.load %arg1[%c5, %c0_65, %c0_66] : memref<17x8x128xf32, #tpu.memory_space<vmem>>, vector<1x8x128xf32>
    %143 = vector.shape_cast %142 : vector<1x8x128xf32> to vector<8x128xf32>
    %cst_67 = arith.constant 0.000000e+00 : f32
    %144 = vector.broadcast %cst_67 : f32 to vector<8x128xf32>
    %145 = arith.cmpf oeq, %16, %144 : vector<8x128xf32>
    %146 = arith.extui %145 : vector<8x128xi1> to vector<8x128xi32>
    %147 = arith.sitofp %146 : vector<8x128xi32> to vector<8x128xf32>
    %cst_68 = arith.constant 0.000000e+00 : f32
    %148 = vector.broadcast %cst_68 : f32 to vector<8x128xf32>
    %149 = arith.maximumf %143, %148 : vector<8x128xf32>
    %150 = arith.mulf %143, %147 : vector<8x128xf32>
    %151 = arith.subf %149, %150 : vector<8x128xf32>
    %152 = math.absf %143 : vector<8x128xf32>
    %cst_69 = arith.constant 0.000000e+00 : f32
    %153 = vector.broadcast %cst_69 : f32 to vector<8x128xf32>
    %154 = arith.subf %153, %152 : vector<8x128xf32>
    %155 = math.exp %154 : vector<8x128xf32>
    %cst_70 = arith.constant 1.000000e+00 : f32
    %156 = vector.broadcast %cst_70 : f32 to vector<8x128xf32>
    %157 = arith.addf %156, %155 : vector<8x128xf32>
    %158 = math.log %157 : vector<8x128xf32>
    %159 = arith.addf %151, %158 : vector<8x128xf32>
    %160 = arith.addf %141, %159 : vector<8x128xf32>
    %c6 = arith.constant 6 : index
    %c0_71 = arith.constant 0 : index
    %c0_72 = arith.constant 0 : index
    %161 = vector.load %arg1[%c6, %c0_71, %c0_72] : memref<17x8x128xf32, #tpu.memory_space<vmem>>, vector<1x8x128xf32>
    %162 = vector.shape_cast %161 : vector<1x8x128xf32> to vector<8x128xf32>
    %cst_73 = arith.constant 1.000000e+00 : f32
    %163 = vector.broadcast %cst_73 : f32 to vector<8x128xf32>
    %164 = arith.cmpf oeq, %16, %163 : vector<8x128xf32>
    %165 = arith.extui %164 : vector<8x128xi1> to vector<8x128xi32>
    %166 = arith.sitofp %165 : vector<8x128xi32> to vector<8x128xf32>
    %cst_74 = arith.constant 0.000000e+00 : f32
    %167 = vector.broadcast %cst_74 : f32 to vector<8x128xf32>
    %168 = arith.maximumf %162, %167 : vector<8x128xf32>
    %169 = arith.mulf %162, %166 : vector<8x128xf32>
    %170 = arith.subf %168, %169 : vector<8x128xf32>
    %171 = math.absf %162 : vector<8x128xf32>
    %cst_75 = arith.constant 0.000000e+00 : f32
    %172 = vector.broadcast %cst_75 : f32 to vector<8x128xf32>
    %173 = arith.subf %172, %171 : vector<8x128xf32>
    %174 = math.exp %173 : vector<8x128xf32>
    %cst_76 = arith.constant 1.000000e+00 : f32
    %175 = vector.broadcast %cst_76 : f32 to vector<8x128xf32>
    %176 = arith.addf %175, %174 : vector<8x128xf32>
    %177 = math.log %176 : vector<8x128xf32>
    %178 = arith.addf %170, %177 : vector<8x128xf32>
    %179 = arith.addf %160, %178 : vector<8x128xf32>
    %c7 = arith.constant 7 : index
    %c0_77 = arith.constant 0 : index
    %c0_78 = arith.constant 0 : index
    %180 = vector.load %arg1[%c7, %c0_77, %c0_78] : memref<17x8x128xf32, #tpu.memory_space<vmem>>, vector<1x8x128xf32>
    %181 = vector.shape_cast %180 : vector<1x8x128xf32> to vector<8x128xf32>
    %cst_79 = arith.constant 2.000000e+00 : f32
    %182 = vector.broadcast %cst_79 : f32 to vector<8x128xf32>
    %183 = arith.cmpf oeq, %16, %182 : vector<8x128xf32>
    %184 = arith.extui %183 : vector<8x128xi1> to vector<8x128xi32>
    %185 = arith.sitofp %184 : vector<8x128xi32> to vector<8x128xf32>
    %cst_80 = arith.constant 0.000000e+00 : f32
    %186 = vector.broadcast %cst_80 : f32 to vector<8x128xf32>
    %187 = arith.maximumf %181, %186 : vector<8x128xf32>
    %188 = arith.mulf %181, %185 : vector<8x128xf32>
    %189 = arith.subf %187, %188 : vector<8x128xf32>
    %190 = math.absf %181 : vector<8x128xf32>
    %cst_81 = arith.constant 0.000000e+00 : f32
    %191 = vector.broadcast %cst_81 : f32 to vector<8x128xf32>
    %192 = arith.subf %191, %190 : vector<8x128xf32>
    %193 = math.exp %192 : vector<8x128xf32>
    %cst_82 = arith.constant 1.000000e+00 : f32
    %194 = vector.broadcast %cst_82 : f32 to vector<8x128xf32>
    %195 = arith.addf %194, %193 : vector<8x128xf32>
    %196 = math.log %195 : vector<8x128xf32>
    %197 = arith.addf %189, %196 : vector<8x128xf32>
    %198 = arith.addf %179, %197 : vector<8x128xf32>
    %c8 = arith.constant 8 : index
    %c0_83 = arith.constant 0 : index
    %c0_84 = arith.constant 0 : index
    %199 = vector.load %arg1[%c8, %c0_83, %c0_84] : memref<17x8x128xf32, #tpu.memory_space<vmem>>, vector<1x8x128xf32>
    %200 = vector.shape_cast %199 : vector<1x8x128xf32> to vector<8x128xf32>
    %cst_85 = arith.constant 3.000000e+00 : f32
    %201 = vector.broadcast %cst_85 : f32 to vector<8x128xf32>
    %202 = arith.cmpf oeq, %16, %201 : vector<8x128xf32>
    %203 = arith.extui %202 : vector<8x128xi1> to vector<8x128xi32>
    %204 = arith.sitofp %203 : vector<8x128xi32> to vector<8x128xf32>
    %cst_86 = arith.constant 0.000000e+00 : f32
    %205 = vector.broadcast %cst_86 : f32 to vector<8x128xf32>
    %206 = arith.maximumf %200, %205 : vector<8x128xf32>
    %207 = arith.mulf %200, %204 : vector<8x128xf32>
    %208 = arith.subf %206, %207 : vector<8x128xf32>
    %209 = math.absf %200 : vector<8x128xf32>
    %cst_87 = arith.constant 0.000000e+00 : f32
    %210 = vector.broadcast %cst_87 : f32 to vector<8x128xf32>
    %211 = arith.subf %210, %209 : vector<8x128xf32>
    %212 = math.exp %211 : vector<8x128xf32>
    %cst_88 = arith.constant 1.000000e+00 : f32
    %213 = vector.broadcast %cst_88 : f32 to vector<8x128xf32>
    %214 = arith.addf %213, %212 : vector<8x128xf32>
    %215 = math.log %214 : vector<8x128xf32>
    %216 = arith.addf %208, %215 : vector<8x128xf32>
    %217 = arith.addf %198, %216 : vector<8x128xf32>
    %c0_89 = arith.constant 0 : index
    %c0_90 = arith.constant 0 : index
    %218 = vector.load %arg4[%c0_89, %c0_90] : memref<8x128xf32, #tpu.memory_space<vmem>>, vector<8x128xf32>
    %cst_91 = arith.constant 0.000000e+00 : f32
    %219 = vector.broadcast %cst_91 : f32 to vector<8x128xf32>
    %220 = arith.select %127, %217, %219 : vector<8x128xi1>, vector<8x128xf32>
    %221 = vector.shape_cast %220 : vector<8x128xf32> to vector<1x8x128xf32>
    %cst_92 = arith.constant dense<0.000000e+00> : vector<1xf32>
    %222 = vector.multi_reduction <add>, %221, %cst_92 [1, 2] : vector<1x8x128xf32> to vector<1xf32>
    %223 = vector.shape_cast %222 : vector<1xf32> to vector<1x1x1xf32>
    %224 = vector.extract %223[0, 0, 0] : f32 from vector<1x1x1xf32>
    %225 = vector.broadcast %224 : f32 to vector<1x1xf32>
    %226 = vector.broadcast %225 : vector<1x1xf32> to vector<8x128xf32>
    %227 = arith.addf %218, %226 : vector<8x128xf32>
    %c0_93 = arith.constant 0 : index
    %c0_94 = arith.constant 0 : index
    %228 = vector.load %arg4[%c0_93, %c0_94] : memref<8x128xf32, #tpu.memory_space<vmem>>, vector<8x128xf32>
    tpu.vector_store %arg4[%c0_93, %c0_94], %227 {strides = array<i32>} : memref<8x128xf32, #tpu.memory_space<vmem>>, vector<8x128xf32>,
    return
  }
  func.func @transform_0(%arg0: i32) -> (i32, i32, i32) {
    %c0_i32 = arith.constant 0 : i32
    %c0_i32_0 = arith.constant 0 : i32
    %c0_i32_1 = arith.constant 0 : i32
    return %c0_i32, %c0_i32_0, %arg0 : i32, i32, i32
  }
  func.func @transform_1(%arg0: i32) -> (i32, i32) {
    %c0_i32 = arith.constant 0 : i32
    %c0_i32_0 = arith.constant 0 : i32
    return %c0_i32, %arg0 : i32, i32
  }
  func.func @transform_2(%arg0: i32) -> (i32, i32) {
    %c0_i32 = arith.constant 0 : i32
    %c0_i32_0 = arith.constant 0 : i32
    %c0_i32_1 = arith.constant 0 : i32
    return %c0_i32, %c0_i32_0 : i32, i32
  }
  func.func @transform_3(%arg0: i32) -> (i32, i32) {
    %c0_i32 = arith.constant 0 : i32
    %c0_i32_0 = arith.constant 0 : i32
    %c0_i32_1 = arith.constant 0 : i32
    return %c0_i32, %c0_i32_0 : i32, i32
  }
}

module attributes {stable_mosaic.version = 11 : i64} {
  func.func @_bce_sum_kernel(%arg0: i32, %arg1: i32, %arg2: memref<8x128xf32, #tpu.memory_space<vmem>>, %arg3: memref<8x128xf32, #tpu.memory_space<vmem>>, %arg4: memref<8x128xf32, #tpu.memory_space<vmem>>, %arg5: memref<8x128xf32, #tpu.memory_space<vmem>>) attributes {dimension_semantics = [#tpu.dimension_semantics<parallel>, #tpu.dimension_semantics<arbitrary>], iteration_bounds = array<i64: 1, 2>, scalar_prefetch = 0 : i64, scratch_operands = 1 : i64, tpu.core_type = #tpu.core_type<tc>, window_params = [{transform_indices = @transform_0, window_bounds = array<i64: 8, 128>}, {transform_indices = @transform_1, window_bounds = array<i64: 8, 128>}, {transform_indices = @transform_2, window_bounds = array<i64: 8, 128>}]} {
    %c0_i32 = arith.constant 0 : i32
    %0 = arith.cmpi eq, %arg1, %c0_i32 : i32
    %1 = arith.extui %0 : i1 to i32
    %c0_i32_0 = arith.constant 0 : i32
    %2 = arith.cmpi ne, %1, %c0_i32_0 : i32
    scf.if %2 {
      %cst_13 = arith.constant 0.000000e+00 : f32
      %35 = vector.broadcast %cst_13 : f32 to vector<8x128xf32>
      %c0_14 = arith.constant 0 : index
      %c0_15 = arith.constant 0 : index
      %36 = vector.load %arg5[%c0_14, %c0_15] : memref<8x128xf32, #tpu.memory_space<vmem>>, vector<8x128xf32>
      tpu.vector_store %arg5[%c0_14, %c0_15], %35 {strides = array<i32>} : memref<8x128xf32, #tpu.memory_space<vmem>>, vector<8x128xf32>,
    } else {
    }
    %c0 = arith.constant 0 : index
    %c0_1 = arith.constant 0 : index
    %3 = vector.load %arg2[%c0, %c0_1] : memref<8x128xf32, #tpu.memory_space<vmem>>, vector<8x128xf32>
    %c0_2 = arith.constant 0 : index
    %c0_3 = arith.constant 0 : index
    %4 = vector.load %arg3[%c0_2, %c0_3] : memref<8x128xf32, #tpu.memory_space<vmem>>, vector<8x128xf32>
    %cst = arith.constant 0.000000e+00 : f32
    %5 = vector.broadcast %cst : f32 to vector<8x128xf32>
    %6 = arith.maximumf %3, %5 : vector<8x128xf32>
    %7 = arith.mulf %3, %4 : vector<8x128xf32>
    %8 = arith.subf %6, %7 : vector<8x128xf32>
    %9 = math.absf %3 : vector<8x128xf32>
    %cst_4 = arith.constant 0.000000e+00 : f32
    %10 = vector.broadcast %cst_4 : f32 to vector<8x128xf32>
    %11 = arith.subf %10, %9 : vector<8x128xf32>
    %12 = math.exp %11 : vector<8x128xf32>
    %cst_5 = arith.constant 1.000000e+00 : f32
    %13 = vector.broadcast %cst_5 : f32 to vector<8x128xf32>
    %14 = arith.addf %13, %12 : vector<8x128xf32>
    %15 = math.log %14 : vector<8x128xf32>
    %16 = arith.addf %8, %15 : vector<8x128xf32>
    %c2_i32 = arith.constant 2 : i32
    %17 = arith.muli %arg0, %c2_i32 : i32
    %18 = arith.addi %17, %arg1 : i32
    %c8_i32 = arith.constant 8 : i32
    %19 = arith.muli %18, %c8_i32 : i32
    %20 = tpu.iota {dimensions = array<i32: 0>} : vector<8x128xi32>
    %21 = vector.broadcast %19 : i32 to vector<8x128xi32>
    %22 = arith.addi %21, %20 : vector<8x128xi32>
    %c12_i32 = arith.constant 12 : i32
    %23 = vector.broadcast %c12_i32 : i32 to vector<8x128xi32>
    %24 = arith.cmpi slt, %22, %23 : vector<8x128xi32>
    %cst_6 = arith.constant 0.000000e+00 : f32
    %25 = vector.broadcast %cst_6 : f32 to vector<8x128xf32>
    %26 = arith.select %24, %16, %25 : vector<8x128xi1>, vector<8x128xf32>
    %c0_7 = arith.constant 0 : index
    %c0_8 = arith.constant 0 : index
    %27 = vector.load %arg5[%c0_7, %c0_8] : memref<8x128xf32, #tpu.memory_space<vmem>>, vector<8x128xf32>
    %28 = vector.shape_cast %26 : vector<8x128xf32> to vector<1x8x128xf32>
    %cst_9 = arith.constant dense<0.000000e+00> : vector<8x128xf32>
    %29 = vector.multi_reduction <add>, %28, %cst_9 [0] : vector<1x8x128xf32> to vector<8x128xf32>
    %30 = arith.addf %27, %29 : vector<8x128xf32>
    %c0_10 = arith.constant 0 : index
    %c0_11 = arith.constant 0 : index
    %31 = vector.load %arg5[%c0_10, %c0_11] : memref<8x128xf32, #tpu.memory_space<vmem>>, vector<8x128xf32>
    tpu.vector_store %arg5[%c0_10, %c0_11], %30 {strides = array<i32>} : memref<8x128xf32, #tpu.memory_space<vmem>>, vector<8x128xf32>,
    %c1_i32 = arith.constant 1 : i32
    %32 = arith.cmpi eq, %arg1, %c1_i32 : i32
    %33 = arith.extui %32 : i1 to i32
    %c0_i32_12 = arith.constant 0 : i32
    %34 = arith.cmpi ne, %33, %c0_i32_12 : i32
    scf.if %34 {
      %c0_13 = arith.constant 0 : index
      %c0_14 = arith.constant 0 : index
      %35 = vector.load %arg5[%c0_13, %c0_14] : memref<8x128xf32, #tpu.memory_space<vmem>>, vector<8x128xf32>
      %c0_15 = arith.constant 0 : index
      %c0_16 = arith.constant 0 : index
      %36 = vector.load %arg4[%c0_15, %c0_16] : memref<8x128xf32, #tpu.memory_space<vmem>>, vector<8x128xf32>
      tpu.vector_store %arg4[%c0_15, %c0_16], %35 {strides = array<i32>} : memref<8x128xf32, #tpu.memory_space<vmem>>, vector<8x128xf32>,
    } else {
    }
    return
  }
  func.func @transform_0(%arg0: i32, %arg1: i32) -> (i32, i32) {
    %c2_i32 = arith.constant 2 : i32
    %0 = arith.muli %arg0, %c2_i32 : i32
    %1 = arith.addi %0, %arg1 : i32
    %c0_i32 = arith.constant 0 : i32
    %c0_i32_0 = arith.constant 0 : i32
    return %1, %c0_i32 : i32, i32
  }
  func.func @transform_1(%arg0: i32, %arg1: i32) -> (i32, i32) {
    %c2_i32 = arith.constant 2 : i32
    %0 = arith.muli %arg0, %c2_i32 : i32
    %1 = arith.addi %0, %arg1 : i32
    %c0_i32 = arith.constant 0 : i32
    %c0_i32_0 = arith.constant 0 : i32
    return %1, %c0_i32 : i32, i32
  }
  func.func @transform_2(%arg0: i32, %arg1: i32) -> (i32, i32) {
    %c0_i32 = arith.constant 0 : i32
    %c0_i32_0 = arith.constant 0 : i32
    return %arg0, %c0_i32 : i32, i32
  }
}

</mosaic_0001>

<llo_original>
// kernel: tile.19
$region0: #{tile.19}
  %s0 = inlined_call_operand.vmem [shape: f32[3,6,6], index: 0, kind: input, shape index: {}]
  %s1 = inlined_call_operand.vmem [shape: f32[18,6], index: 1, kind: output, shape index: {}]
  $region1: #{tile.19} parent=0
    #allocation0 [shape = 'u8[24576]{0}', space=vmem, size = 0x6000, scoped, tag = 'scoped mem for input reshape']
    %s3 = sshllo.u32 0, 4
    %s4 = smul.addr 4, 5
    %s5 = scalar_lea.vmem %s0, %s4
    %v6 = vld [vmem:[%s5] sm:%s3]
    %s7 = scalar_lea.vmem [#allocation0], 40
    %8 = vst [vmem:[%s7] sm:%s3] %v6
    %s9 = smul.addr 4, 4
    %s10 = scalar_lea.vmem %s0, %s9
    %v11 = vld [vmem:[%s10] sm:%s3]
    %s12 = scalar_lea.vmem [#allocation0], 32
    %13 = vst [vmem:[%s12] sm:%s3] %v11
    %s14 = smul.addr 4, 3
    %s15 = scalar_lea.vmem %s0, %s14
    %v16 = vld [vmem:[%s15] sm:%s3]
    %s17 = scalar_lea.vmem [#allocation0], 24
    %18 = vst [vmem:[%s17] sm:%s3] %v16
    %s19 = smul.addr 4, 2
    %s20 = scalar_lea.vmem %s0, %s19
    %v21 = vld [vmem:[%s20] sm:%s3]
    %s22 = scalar_lea.vmem [#allocation0], 16
    %23 = vst [vmem:[%s22] sm:%s3] %v21
    %s24 = scalar_lea.vmem %s0, 4
    %v25 = vld [vmem:[%s24] sm:%s3]
    %s26 = scalar_lea.vmem [#allocation0], 8
    %27 = vst [vmem:[%s26] sm:%s3] %v25
    %v28 = vld [vmem:[%s0] sm:%s3]
    %29 = vst [vmem:[#allocation0] sm:%s3] %v28
    %v30 = vld [vmem:[#allocation0] ss:$8 sm:$0xf]
    %s31 = smov 48
    %v32 = vld [vmem:[#allocation0] ss:$8 sm:%s31]
    %vm33 = vcmask 1045508
    %v34 = vsel %vm33, %v32, %v30
    %vm35 = vcmask 48128
    %36 = vst.msk [vmem:[%s1] sm:$0x3f] %vm35, %v34
    %s37 = scalar_lea.vmem [#allocation0], 2
    %v38 = vld [vmem:[%s37] ss:$8 sm:$0xf]
    %s39 = scalar_lea.vmem [#allocation0], 2
    %s40 = smov 48
    %v41 = vld [vmem:[%s39] ss:$8 sm:%s40]
    %vm42 = vcmask 1045508
    %v43 = vsel %vm42, %v41, %v38
    %44 = vrot.lane.b32.xlu0 %v43, 12
    %v45 = vpop.permute.xlu0 %44
    %vm46 = vcmask 146528
    %47 = vst.msk [vmem:[%s1] sm:$0x3f] %vm46, %v45
    %s48 = scalar_lea.vmem [#allocation0], 1
    %v49 = vld [vmem:[%s48] ss:$8 sm:$0xf]
    %s50 = scalar_lea.vmem [#allocation0], 1
    %s51 = smov 48
    %v52 = vld [vmem:[%s50] ss:$8 sm:%s51]
    %vm53 = vcmask 1045508
    %v54 = vsel %vm53, %v52, %v49
    %55 = vrot.lane.b32.xlu0 %v54, 6
    %v56 = vpop.permute.xlu0 %55
    %vm57 = vcmask 97328
    %58 = vst.msk [vmem:[%s1] sm:$0x3f] %vm57, %v56

// kernel: yolo_head_forward.7
$region0: #{yolo_head_forward.7}
  #allocation0 [shape = 'u32[]', space=smem, size = 0x4, offset = 0x4, fixed_abs, tag = 'smem constant byte address 0x4 - core index']
  #allocation1 [shape = 'u32[144,128]{1,0:T(1,128)}', space=vmem, size = 0x12000, scoped, tag = 'internal scratch']
  %s0 = inlined_call_operand.vmem [shape: f32[17,8,128], index: 0, kind: input, shape index: {}]
  %s1 = inlined_call_operand.vmem [shape: f32[8,128], index: 1, kind: output, shape index: {0}]
  %s2 = inlined_call_operand.vmem [shape: f32[8,128], index: 2, kind: output, shape index: {1}]
  %s3 = inlined_call_operand.vmem [shape: f32[8,128], index: 3, kind: output, shape index: {2}]
  %4 = xla_tuple %s1, %s2, %s3
  %s5 = sld [smem:[#allocation0]]
  $region34: #{yolo_head_forward.7} parent=0
    _
  %s7 = ssub.s32 1, %s5
  %s8 = scalar_select 0, %s7, %s5
  // Predicated region
  $region2: #{yolo_head_forward.7} parent=0 // pred_check
    _
  $region3: #{yolo_head_forward.7} parent=0 // pred_check_branch
    %10 = sbr.rel (0) target = $region5
  $region4: #{yolo_head_forward.7} parent=0 // pred_region
    _
  $region5: #{yolo_head_forward.7} parent=0 // pred_fallthru
    _
  %p11 = scmp.eq.s32.totalorder 0, 0
  // Predicated region
  $region6: #{yolo_head_forward.7} parent=0 // pred_check
    %p12 = pneg %p11
  $region7: #{yolo_head_forward.7} parent=0 // pred_check_branch
    %14 = sbr.rel (%p12) target = $region9
  $region8: #{yolo_head_forward.7} parent=0 // pred_region
    %15 = vst [vmem:[%s2] sm:$0xff] 0.0
    %16 = vst [vmem:[%s3] sm:$0xff] 0.0
  $region9: #{yolo_head_forward.7} parent=0 // pred_fallthru
    _
  %s17 = scalar_lea.vmem %s0, 72
  %v18 = vld [vmem:[%s17] sm:$0xff]
  %s19 = scalar_lea.vmem %s0, 80
  %v20 = vld [vmem:[%s19] sm:$0xff]
  %s21 = scalar_lea.vmem %s0, 88
  %v22 = vld [vmem:[%s21] sm:$0xff]
  %s23 = scalar_lea.vmem %s0, 96
  %v24 = vld [vmem:[%s23] sm:$0xff]
  %s25 = scalar_lea.vmem %s0, 104
  %v26 = vld [vmem:[%s25] sm:$0xff]
  %s27 = scalar_lea.vmem %s0, 112
  %v28 = vld [vmem:[%s27] sm:$0xff]
  %s29 = scalar_lea.vmem %s0, 120
  %v30 = vld [vmem:[%s29] sm:$0xff]
  %s31 = scalar_lea.vmem %s0, 128
  %v32 = vld [vmem:[%s31] sm:$0xff]
  %v33 = vld [vmem:[%s0] sm:$0xff]
  %v34 = vsub.f32 0.0, %v33
  %v35 = vmul.f32 %v34, 1.442695
  %v36 = vpow.pop %v35
  %v37 = vadd.f32 %v36, 1.0
  %v38 = vrcp.pop %v37
  %v39 = vmul.f32 1.0, %v38
  %v40 = vmul.f32 %v39, 2.0
  %v41 = vsub.f32 %v40, 0.5
  %s42 = scalar_lea.vmem %s0, 8
  %v43 = vld [vmem:[%s42] sm:$0xff]
  %v44 = vsub.f32 0.0, %v43
  %v45 = vmul.f32 %v44, 1.442695
  %v46 = vpow.pop %v45
  %v47 = vadd.f32 %v46, 1.0
  %v48 = vrcp.pop %v47
  %v49 = vmul.f32 1.0, %v48
  %v50 = vmul.f32 %v49, 2.0
  %v51 = vsub.f32 %v50, 0.5
  %s52 = scalar_lea.vmem %s0, 16
  %v53 = vld [vmem:[%s52] sm:$0xff]
  %v54 = vsub.f32 0.0, %v53
  %v55 = vmul.f32 %v54, 1.442695
  %v56 = vpow.pop %v55
  %v57 = vadd.f32 %v56, 1.0
  %v58 = vrcp.pop %v57
  %v59 = vmul.f32 1.0, %v58
  %v60 = vmul.f32 %v59, 2.0
  %v61 = vmul.f32 %v60, %v60
  %v62 = vmul.f32 %v61, %v18
  %s63 = scalar_lea.vmem %s0, 24
  %v64 = vld [vmem:[%s63] sm:$0xff]
  %v65 = vsub.f32 0.0, %v64
  %v66 = vmul.f32 %v65, 1.442695
  %v67 = vpow.pop %v66
  %v68 = vadd.f32 %v67, 1.0
  %v69 = vrcp.pop %v68
  %v70 = vmul.f32 1.0, %v69
  %v71 = vmul.f32 %v70, 2.0
  %v72 = vmul.f32 %v71, %v71
  %v73 = vmul.f32 %v72, %v20
  %v74 = vmul.f32 %v62, 0.5
  %v75 = vsub.f32 %v41, %v74
  %v76 = vadd.f32 %v41, %v74
  %v77 = vmul.f32 %v73, 0.5
  %v78 = vsub.f32 %v51, %v77
  %v79 = vadd.f32 %v51, %v77
  %v80 = vmul.f32 %v26, 0.5
  %v81 = vsub.f32 %v22, %v80
  %v82 = vadd.f32 %v22, %v80
  %v83 = vmul.f32 %v28, 0.5
  %v84 = vsub.f32 %v24, %v83
  %v85 = vadd.f32 %v24, %v83
  %v86 = vmin.f32 %v76, %v82
  %v87 = vmax.f32 %v75, %v81
  %v88 = vsub.f32 %v86, %v87
  %v89 = vmax.f32 %v88, 0.0
  %v90 = vmin.f32 %v79, %v85
  %v91 = vmax.f32 %v78, %v84
  %v92 = vsub.f32 %v90, %v91
  %v93 = vmax.f32 %v92, 0.0
  %v94 = vmul.f32 %v89, %v93
  %v95 = vmul.f32 %v62, %v73
  %v96 = vmul.f32 %v26, %v28
  %v97 = vadd.f32 %v95, %v96
  %v98 = vsub.f32 %v97, %v94
  %v99 = vrcp.pop %v98
  %v100 = vmul.f32 %v94, %v99
  %v101 = vmax.f32 %v76, %v82
  %v102 = vmin.f32 %v75, %v81
  %v103 = vsub.f32 %v101, %v102
  %v104 = vadd.f32 %v103, 1e-16
  %v105 = vmax.f32 %v79, %v85
  %v106 = vmin.f32 %v78, %v84
  %v107 = vsub.f32 %v105, %v106
  %v108 = vmul.f32 %v104, %v107
  %v109 = vadd.f32 %v108, 1e-16
  %v110 = vsub.f32 %v109, %v98
  %v111 = vrcp.pop %v109
  %v112 = vmul.f32 %v110, %v111
  %v113 = vsub.f32 %v100, %v112
  %114 = vst [vmem:[%s1] sm:$0xff] %v113
  %vm115 = vcmp.gt.f32.partialorder %v32, 0.0
  %v116 = vld [vmem:[%s2] sm:$0xff]
  %v117 = vsub.f32 1.0, %v113
  %v118 = vsel %vm115, %v117, 0.0
  %119 = vadd.xlane.f32.xlu0 %v118
  %v120 = vpop.xlane.xlu0 %119
  %v121 = vrot.slane %v120, 4
  %v122 = vadd.f32 %v120, %v121
  %v123 = vrot.slane %v122, 2
  %v124 = vadd.f32 %v122, %v123
  %v125 = vrot.slane %v124, 1
  %v126 = vadd.f32 %v124, %v125
  %s127 = vtos %v126
  %v128 = vstv %s127
  %v129 = vadd.f32 %v116, %v128
  %130 = vst [vmem:[%s2] sm:$0xff] %v129
  %s131 = scalar_lea.vmem %s0, 40
  %v132 = vld [vmem:[%s131] sm:$0xff]
  %vm133 = vcmp.eq.f32.partialorder %v30, 0.0
  %v134 = vsel %vm133, 1, 0
  %v135 = vcvt.s32.f32 %v134
  %v136 = vmax.f32 %v132, 0.0
  %v137 = vmul.f32 %v132, %v135
  %v138 = vsub.f32 %v136, %v137
  %v139 = vand.u32 2147483647, %v132
  %v140 = vsub.f32 0.0, %v139
  %v141 = vmul.f32 %v140, 1.442695
  %v142 = vpow.pop %v141
  %v143 = vadd.f32 %v142, 1.0
  %v144 = vlog2.pop %v143
  %v145 = vmul.f32 %v144, 0.6931472
  %v146 = vadd.f32 %v138, %v145
  %v147 = vadd.f32 %v146, 0.0
  %s148 = scalar_lea.vmem %s0, 48
  %v149 = vld [vmem:[%s148] sm:$0xff]
  %vm150 = vcmp.eq.f32.partialorder %v30, 1.0
  %v151 = vsel %vm150, 1, 0
  %v152 = vcvt.s32.f32 %v151
  %v153 = vmax.f32 %v149, 0.0
  %v154 = vmul.f32 %v149, %v152
  %v155 = vsub.f32 %v153, %v154
  %v156 = vand.u32 2147483647, %v149
  %v157 = vsub.f32 0.0, %v156
  %v158 = vmul.f32 %v157, 1.442695
  %v159 = vpow.pop %v158
  %v160 = vadd.f32 %v159, 1.0
  %v161 = vlog2.pop %v160
  %v162 = vmul.f32 %v161, 0.6931472
  %v163 = vadd.f32 %v155, %v162
  %v164 = vadd.f32 %v147, %v163
  %s165 = scalar_lea.vmem %s0, 56
  %v166 = vld [vmem:[%s165] sm:$0xff]
  %vm167 = vcmp.eq.f32.partialorder %v30, 2.0
  %v168 = vsel %vm167, 1, 0
  %v169 = vcvt.s32.f32 %v168
  %v170 = vmax.f32 %v166, 0.0
  %v171 = vmul.f32 %v166, %v169
  %v172 = vsub.f32 %v170, %v171
  %v173 = vand.u32 2147483647, %v166
  %v174 = vsub.f32 0.0, %v173
  %v175 = vmul.f32 %v174, 1.442695
  %v176 = vpow.pop %v175
  %v177 = vadd.f32 %v176, 1.0
  %v178 = vlog2.pop %v177
  %v179 = vmul.f32 %v178, 0.6931472
  %v180 = vadd.f32 %v172, %v179
  %v181 = vadd.f32 %v164, %v180
  %s182 = scalar_lea.vmem %s0, 64
  %v183 = vld [vmem:[%s182] sm:$0xff]
  %vm184 = vcmp.eq.f32.partialorder %v30, 3.0
  %v185 = vsel %vm184, 1, 0
  %v186 = vcvt.s32.f32 %v185
  %v187 = vmax.f32 %v183, 0.0
  %v188 = vmul.f32 %v183, %v186
  %v189 = vsub.f32 %v187, %v188
  %v190 = vand.u32 2147483647, %v183
  %v191 = vsub.f32 0.0, %v190
  %v192 = vmul.f32 %v191, 1.442695
  %v193 = vpow.pop %v192
  %v194 = vadd.f32 %v193, 1.0
  %v195 = vlog2.pop %v194
  %v196 = vmul.f32 %v195, 0.6931472
  %v197 = vadd.f32 %v189, %v196
  %v198 = vadd.f32 %v181, %v197
  %v199 = vld [vmem:[%s3] sm:$0xff]
  %v200 = vsel %vm115, %v198, 0.0
  %201 = vadd.xlane.f32.xlu0 %v200
  %v202 = vpop.xlane.xlu0 %201
  %v203 = vrot.slane %v202, 4
  %v204 = vadd.f32 %v202, %v203
  %v205 = vrot.slane %v204, 2
  %v206 = vadd.f32 %v204, %v205
  %v207 = vrot.slane %v206, 1
  %v208 = vadd.f32 %v206, %v207
  %s209 = vtos %v208
  %v210 = vstv %s209
  %v211 = vadd.f32 %v199, %v210
  %212 = vst [vmem:[%s3] sm:$0xff] %v211
  // Predicated region
  $region10: #{yolo_head_forward.7} parent=0 // pred_check
    _
  $region11: #{yolo_head_forward.7} parent=0 // pred_check_branch
    %214 = sbr.rel (0) target = $region13
  $region12: #{yolo_head_forward.7} parent=0 // pred_region
    _
  $region13: #{yolo_head_forward.7} parent=0 // pred_fallthru
    _
  // Predicated region
  $region14: #{yolo_head_forward.7} parent=0 // pred_check
    _
  $region15: #{yolo_head_forward.7} parent=0 // pred_check_branch
    %216 = sbr.rel (0) target = $region17
  $region16: #{yolo_head_forward.7} parent=0 // pred_region
    _
  $region17: #{yolo_head_forward.7} parent=0 // pred_fallthru
    _
  // Predicated region
  $region18: #{yolo_head_forward.7} parent=0 // pred_check
    _
  $region19: #{yolo_head_forward.7} parent=0 // pred_check_branch
    %218 = sbr.rel (0) target = $region21
  $region20: #{yolo_head_forward.7} parent=0 // pred_region
    _
  $region21: #{yolo_head_forward.7} parent=0 // pred_fallthru
    _
  // Predicated region
  $region22: #{yolo_head_forward.7} parent=0 // pred_check
    _
  $region23: #{yolo_head_forward.7} parent=0 // pred_check_branch
    %220 = sbr.rel (0) target = $region25
  $region24: #{yolo_head_forward.7} parent=0 // pred_region
    _
  $region25: #{yolo_head_forward.7} parent=0 // pred_fallthru
    _
  // Predicated region
  $region26: #{yolo_head_forward.7} parent=0 // pred_check
    _
  $region27: #{yolo_head_forward.7} parent=0 // pred_check_branch
    %222 = sbr.rel (0) target = $region29
  $region28: #{yolo_head_forward.7} parent=0 // pred_region
    _
  $region29: #{yolo_head_forward.7} parent=0 // pred_fallthru
    _
  // Predicated region
  $region30: #{yolo_head_forward.7} parent=0 // pred_check
    _
  $region31: #{yolo_head_forward.7} parent=0 // pred_check_branch
    %224 = sbr.rel (0) target = $region33
  $region32: #{yolo_head_forward.7} parent=0 // pred_region
    _
  $region33: #{yolo_head_forward.7} parent=0 // pred_fallthru
    _

// kernel: squeeze.67
$region0: #{squeeze.67}
  %s0 = inlined_call_operand.vmem [shape: f32[2,3,1,16,16], index: 0, kind: input, shape index: {}]
  %s1 = inlined_call_operand.vmem [shape: f32[12,128], index: 1, kind: output, shape index: {}]
  %v2 = vld [vmem:[%s0] ss:$8 sm:$0xf]
  %v3 = vld [vmem:[%s0] ss:$8 sm:$0xf0]
  %vm4 = vcmask 1047556
  %v5 = vsel %vm4, %v3, %v2
  %vm6 = vcmask 130048
  %7 = vst.msk [vmem:[%s1] sm:$0xff] %vm6, %v5
  %s8 = scalar_lea.vmem %s0, 64
  %v9 = vld [vmem:[%s8] ss:$8 sm:$0xf]
  %vm10 = vcmask 130048
  %s11 = scalar_lea.vmem %s1, 8
  %12 = vst.msk [vmem:[%s11] sm:$0xf] %vm10, %v9
  %s13 = scalar_lea.vmem %s0, 7
  %v14 = vld [vmem:[%s13] ss:$8 sm:$0xf]
  %s15 = scalar_lea.vmem %s0, 7
  %v16 = vld [vmem:[%s15] ss:$8 sm:$0xf0]
  %vm17 = vcmask 1047556
  %v18 = vsel %vm17, %v16, %v14
  %19 = vrot.lane.b32.xlu0 %v18, 112
  %v20 = vpop.permute.xlu0 %19
  %vm21 = vcmask 1048448
  %22 = vst.msk [vmem:[%s1] sm:$0xff] %vm21, %v20
  %s23 = scalar_lea.vmem %s0, 71
  %v24 = vld [vmem:[%s23] ss:$8 sm:$0xf]
  %25 = vrot.lane.b32.xlu0 %v24, 112
  %v26 = vpop.permute.xlu0 %25
  %vm27 = vcmask 1048448
  %s28 = scalar_lea.vmem %s1, 8
  %29 = vst.msk [vmem:[%s28] sm:$0xf] %vm27, %v26
  %s30 = scalar_lea.vmem %s0, 6
  %v31 = vld [vmem:[%s30] ss:$8 sm:$0xf]
  %s32 = scalar_lea.vmem %s0, 6
  %v33 = vld [vmem:[%s32] ss:$8 sm:$0xf0]
  %vm34 = vcmask 1047556
  %v35 = vsel %vm34, %v33, %v31
  %36 = vrot.lane.b32.xlu0 %v35, 96
  %v37 = vpop.permute.xlu0 %36
  %vm38 = vcmask 917248
  %39 = vst.msk [vmem:[%s1] sm:$0xff] %vm38, %v37
  %s40 = scalar_lea.vmem %s0, 70
  %v41 = vld [vmem:[%s40] ss:$8 sm:$0xf]
  %42 = vrot.lane.b32.xlu0 %v41, 96
  %v43 = vpop.permute.xlu0 %42
  %vm44 = vcmask 917248
  %s45 = scalar_lea.vmem %s1, 8
  %46 = vst.msk [vmem:[%s45] sm:$0xf] %vm44, %v43
  %s47 = scalar_lea.vmem %s0, 5
  %v48 = vld [vmem:[%s47] ss:$8 sm:$0xf]
  %s49 = scalar_lea.vmem %s0, 5
  %v50 = vld [vmem:[%s49] ss:$8 sm:$0xf0]
  %vm51 = vcmask 1047556
  %v52 = vsel %vm51, %v50, %v48
  %53 = vrot.lane.b32.xlu0 %v52, 80
  %v54 = vpop.permute.xlu0 %53
  %vm55 = vcmask 786048
  %56 = vst.msk [vmem:[%s1] sm:$0xff] %vm55, %v54
  %s57 = scalar_lea.vmem %s0, 69
  %v58 = vld [vmem:[%s57] ss:$8 sm:$0xf]
  %59 = vrot.lane.b32.xlu0 %v58, 80
  %v60 = vpop.permute.xlu0 %59
  %vm61 = vcmask 786048
  %s62 = scalar_lea.vmem %s1, 8
  %63 = vst.msk [vmem:[%s62] sm:$0xf] %vm61, %v60
  %s64 = scalar_lea.vmem %s0, 4
  %v65 = vld [vmem:[%s64] ss:$8 sm:$0xf]
  %s66 = scalar_lea.vmem %s0, 4
  %v67 = vld [vmem:[%s66] ss:$8 sm:$0xf0]
  %vm68 = vcmask 1047556
  %v69 = vsel %vm68, %v67, %v65
  %70 = vrot.lane.b32.xlu0 %v69, 64
  %v71 = vpop.permute.xlu0 %70
  %vm72 = vcmask 654848
  %73 = vst.msk [vmem:[%s1] sm:$0xff] %vm72, %v71
  %s74 = scalar_lea.vmem %s0, 68
  %v75 = vld [vmem:[%s74] ss:$8 sm:$0xf]
  %76 = vrot.lane.b32.xlu0 %v75, 64
  %v77 = vpop.permute.xlu0 %76
  %vm78 = vcmask 654848
  %s79 = scalar_lea.vmem %s1, 8
  %80 = vst.msk [vmem:[%s79] sm:$0xf] %vm78, %v77
  %s81 = scalar_lea.vmem %s0, 3
  %v82 = vld [vmem:[%s81] ss:$8 sm:$0xf]
  %s83 = scalar_lea.vmem %s0, 3
  %v84 = vld [vmem:[%s83] ss:$8 sm:$0xf0]
  %vm85 = vcmask 1047556
  %v86 = vsel %vm85, %v84, %v82
  %87 = vrot.lane.b32.xlu0 %v86, 48
  %v88 = vpop.permute.xlu0 %87
  %vm89 = vcmask 523648
  %90 = vst.msk [vmem:[%s1] sm:$0xff] %vm89, %v88
  %s91 = scalar_lea.vmem %s0, 67
  %v92 = vld [vmem:[%s91] ss:$8 sm:$0xf]
  %93 = vrot.lane.b32.xlu0 %v92, 48
  %v94 = vpop.permute.xlu0 %93
  %vm95 = vcmask 523648
  %s96 = scalar_lea.vmem %s1, 8
  %97 = vst.msk [vmem:[%s96] sm:$0xf] %vm95, %v94
  %s98 = scalar_lea.vmem %s0, 2
  %v99 = vld [vmem:[%s98] ss:$8 sm:$0xf]
  %s100 = scalar_lea.vmem %s0, 2
  %v101 = vld [vmem:[%s100] ss:$8 sm:$0xf0]
  %vm102 = vcmask 1047556
  %v103 = vsel %vm102, %v101, %v99
  %104 = vrot.lane.b32.xlu0 %v103, 32
  %v105 = vpop.permute.xlu0 %104
  %vm106 = vcmask 392448
  %107 = vst.msk [vmem:[%s1] sm:$0xff] %vm106, %v105
  %s108 = scalar_lea.vmem %s0, 66
  %v109 = vld [vmem:[%s108] ss:$8 sm:$0xf]
  %110 = vrot.lane.b32.xlu0 %v109, 32
  %v111 = vpop.permute.xlu0 %110
  %vm112 = vcmask 392448
  %s113 = scalar_lea.vmem %s1, 8
  %114 = vst.msk [vmem:[%s113] sm:$0xf] %vm112, %v111
  %s115 = scalar_lea.vmem %s0, 1
  %v116 = vld [vmem:[%s115] ss:$8 sm:$0xf]
  %s117 = scalar_lea.vmem %s0, 1
  %v118 = vld [vmem:[%s117] ss:$8 sm:$0xf0]
  %vm119 = vcmask 1047556
  %v120 = vsel %vm119, %v118, %v116
  %121 = vrot.lane.b32.xlu0 %v120, 16
  %v122 = vpop.permute.xlu0 %121
  %vm123 = vcmask 261248
  %124 = vst.msk [vmem:[%s1] sm:$0xff] %vm123, %v122
  %s125 = scalar_lea.vmem %s0, 65
  %v126 = vld [vmem:[%s125] ss:$8 sm:$0xf]
  %127 = vrot.lane.b32.xlu0 %v126, 16
  %v128 = vpop.permute.xlu0 %127
  %vm129 = vcmask 261248
  %s130 = scalar_lea.vmem %s1, 8
  %131 = vst.msk [vmem:[%s130] sm:$0xf] %vm129, %v128

// kernel: yolo_head_forward.5
$region0: #{yolo_head_forward.5}
  #allocation0 [shape = 'u32[]', space=smem, size = 0x4, offset = 0x4, fixed_abs, tag = 'smem constant byte address 0x4 - core index']
  #allocation1 [shape = 'u32[144,128]{1,0:T(1,128)}', space=vmem, size = 0x12000, scoped, tag = 'internal scratch']
  #allocation2 [shape = 'f32[8,128]{1,0:T(8,128)}', space=vmem, size = 0x1000, scoped, tag = 'scratch operand']
  %s0 = inlined_call_operand.vmem [shape: f32[12,128], index: 0, kind: input, shape index: {}]
  %s1 = inlined_call_operand.vmem [shape: f32[12,128], index: 1, kind: input, shape index: {}]
  %s2 = inlined_call_operand.vmem [shape: f32[8,128], index: 2, kind: output, shape index: {}]
  %s3 = sld [smem:[#allocation0]]
  $region49: #{yolo_head_forward.5} parent=0
    _
  %s5 = ssub.s32 1, %s3
  %s6 = scalar_select 0, %s5, %s3
  loop: start=0, step=1, limit=4
  $region2: #{yolo_head_forward.5} parent=0 // loop_pre_header
    _
  $region3: #{yolo_head_forward.5} parent=0 // loop_header
    %s8 = sphi 0, %s12
    %p9 = scmp.ge.s32.totalorder %s8, 4
    %s15 = sphi 0, %s27
    %s16 = sphi 0, %s23
    %s17 = sphi 0, %s15
    %s18 = sphi 0, %s16
    %s19 = sphi 0, %s17
    %s20 = sphi 0, %s18
    %s34 = sphi 0, %s36
    %s37 = sphi 0, %s34
    %s38 = sphi 0, %s37
    %s54 = sphi 0, %s38
    %s64 = sphi 0, %s66
    %s67 = sphi 0, %s64
    %s68 = sphi 0, %s67
    %s84 = sphi 0, %s68
    %s90 = sphi 0, %s92
    %s93 = sphi 0, %s90
    %s94 = sphi 0, %s93
    %s110 = sphi 0, %s94
  $region4: #{yolo_head_forward.5} parent=0 // loop_header_branch
    %11 = sbr.rel (%p9) target = $region8
  $region5: #{yolo_head_forward.5} parent=0 // loop_body
    %s13 = ssub.s32 %s8, 1
    %s14 = ssub.s32 %s8, 2
    %s21 = sadd.s32 1, %s16
    %p22 = scmp.ge.s32.totalorder %s21, 2
    %s23 = scalar_select %p22, 0, %s21
    %s24 = sadd.s32 1, %s15
    %s25 = scalar_select %p22, %s24, %s15
    %p26 = scmp.ge.s32.totalorder %s25, 1
    %s27 = scalar_select %p26, 0, %s25
    %s28 = smul.u32 %s15, 2
    %s29 = sadd.s32 %s28, %s16
    %s30 = smul.u32 %s27, 2
    %s31 = sadd.s32 %s30, %s23
    %s32 = ssub.s32 %s29, %s31
    %p33 = scmp.eq.s32.totalorder %s32, 0
    %s35 = sadd.s32 %s34, 1
    %s36 = scalar_select %p33, %s34, %s35
    %p39 = pneg %p33
    %p40 = scmp.eq.s32.totalorder %s8, 1
    %p41 = por %p39, %p40
    %p42 = scmp.ne.s32.totalorder %s34, %s37
    %p43 = scmp.eq.s32.totalorder %s8, 0
    %p44 = por %p42, %p43
    %p45 = scmp.ne.s32.totalorder %s34, %s37
    %p46 = scmp.eq.s32.totalorder %s13, 1
    %p47 = por %p45, %p46
    %p48 = scmp.ne.s32.totalorder %s37, %s38
    %p49 = scmp.eq.s32.totalorder %s13, 0
    %p50 = por %p48, %p49
    %p51 = scmp.ne.s32.totalorder %s37, %s38
    %p52 = scmp.eq.s32.totalorder %s14, 1
    %p53 = por %p51, %p52
    %p55 = scmp.ne.s32.totalorder %s38, %s54
    %p56 = scmp.eq.s32.totalorder %s14, 0
    %p57 = por %p55, %p56
    %s58 = smul.u32 %s15, 2
    %s59 = sadd.s32 %s58, %s16
    %s60 = smul.u32 %s27, 2
    %s61 = sadd.s32 %s60, %s23
    %s62 = ssub.s32 %s59, %s61
    %p63 = scmp.eq.s32.totalorder %s62, 0
    %s65 = sadd.s32 %s64, 1
    %s66 = scalar_select %p63, %s64, %s65
    %p69 = pneg %p63
    %p70 = scmp.eq.s32.totalorder %s8, 1
    %p71 = por %p69, %p70
    %p72 = scmp.ne.s32.totalorder %s64, %s67
    %p73 = scmp.eq.s32.totalorder %s8, 0
    %p74 = por %p72, %p73
    %p75 = scmp.ne.s32.totalorder %s64, %s67
    %p76 = scmp.eq.s32.totalorder %s13, 1
    %p77 = por %p75, %p76
    %p78 = scmp.ne.s32.totalorder %s67, %s68
    %p79 = scmp.eq.s32.totalorder %s13, 0
    %p80 = por %p78, %p79
    %p81 = scmp.ne.s32.totalorder %s67, %s68
    %p82 = scmp.eq.s32.totalorder %s14, 1
    %p83 = por %p81, %p82
    %p85 = scmp.ne.s32.totalorder %s68, %s84
    %p86 = scmp.eq.s32.totalorder %s14, 0
    %p87 = por %p85, %p86
    %s88 = ssub.s32 %s15, %s27
    %p89 = scmp.eq.s32.totalorder %s88, 0
    %s91 = sadd.s32 %s90, 1
    %s92 = scalar_select %p89, %s90, %s91
    %p95 = pneg %p89
    %p96 = scmp.eq.s32.totalorder %s8, 1
    %p97 = por %p95, %p96
    %p98 = scmp.ne.s32.totalorder %s90, %s93
    %p99 = scmp.eq.s32.totalorder %s8, 0
    %p100 = por %p98, %p99
    %p101 = scmp.ne.s32.totalorder %s90, %s93
    %p102 = scmp.eq.s32.totalorder %s13, 1
    %p103 = por %p101, %p102
    %p104 = scmp.ne.s32.totalorder %s93, %s94
    %p105 = scmp.eq.s32.totalorder %s13, 0
    %p106 = por %p104, %p105
    %p107 = scmp.ne.s32.totalorder %s93, %s94
    %p108 = scmp.eq.s32.totalorder %s14, 1
    %p109 = por %p107, %p108
    %p111 = scmp.ne.s32.totalorder %s94, %s110
    %p112 = scmp.eq.s32.totalorder %s14, 0
    %p113 = por %p111, %p112
    %p114 = scmp.le.s32.totalorder 1, %s8
    %p115 = scmp.lt.s32.totalorder %s8, 3
    %p116 = pnand %p114, %p115
    %p117 = pneg %p116
    // Predicated region
    $region9: #{yolo_head_forward.5} parent=5 // pred_check
      _
    $region10: #{yolo_head_forward.5} parent=5 // pred_check_branch
      %119 = sbr.rel (%p116) target = $region12
    $region11: #{yolo_head_forward.5} parent=5 // pred_region
      %s120 = ssub.s32 %s8, 1
    $region12: #{yolo_head_forward.5} parent=5 // pred_fallthru
      _
    %p121 = scmp.lt.s32.totalorder %s8, 2
    // Predicated region
    $region13: #{yolo_head_forward.5} parent=5 // pred_check
      %p122 = pneg %p121
    $region14: #{yolo_head_forward.5} parent=5 // pred_check_branch
      %124 = sbr.rel (%p122) target = $region16
    $region15: #{yolo_head_forward.5} parent=5 // pred_region
      // Predicated region
      $region17: #{yolo_head_forward.5} parent=15 // pred_check
        %p125 = pneg %p44
      $region18: #{yolo_head_forward.5} parent=15 // pred_check_branch
        %127 = sbr.rel (%p125) target = $region20
      $region19: #{yolo_head_forward.5} parent=15 // pred_region
        %s128 = smul.u32 %s15, 2
        %s129 = sadd.s32 %s128, %s16
        %p130 = scmp.lt.s32.totalorder %s129, 1
        %s131 = scalar_select %p130, %s129, 1
        %s132 = smul.addr %s131, 8
        %s133 = scalar_lea.vmem %s0, %s132
        %s134 = smul.u32 %s15, 2
        %s135 = sadd.s32 %s134, %s16
      $region20: #{yolo_head_forward.5} parent=15 // pred_fallthru
        _
      // Predicated region
      $region21: #{yolo_head_forward.5} parent=15 // pred_check
        %p136 = pneg %p74
      $region22: #{yolo_head_forward.5} parent=15 // pred_check_branch
        %138 = sbr.rel (%p136) target = $region24
      $region23: #{yolo_head_forward.5} parent=15 // pred_region
        %s139 = smul.u32 %s15, 2
        %s140 = sadd.s32 %s139, %s16
        %p141 = scmp.lt.s32.totalorder %s140, 1
        %s142 = scalar_select %p141, %s140, 1
        %s143 = smul.addr %s142, 8
        %s144 = scalar_lea.vmem %s1, %s143
        %s145 = smul.u32 %s15, 2
        %s146 = sadd.s32 %s145, %s16
      $region24: #{yolo_head_forward.5} parent=15 // pred_fallthru
        _
    $region16: #{yolo_head_forward.5} parent=5 // pred_fallthru
      _
    %p147 = scmp.le.s32.totalorder 1, %s8
    %p148 = scmp.lt.s32.totalorder %s8, 3
    %p149 = pnand %p147, %p148
    %p150 = pneg %p149
    // Predicated region
    $region25: #{yolo_head_forward.5} parent=5 // pred_check
      _
    $region26: #{yolo_head_forward.5} parent=5 // pred_check_branch
      %152 = sbr.rel (%p149) target = $region28
    $region27: #{yolo_head_forward.5} parent=5 // pred_region
      %s153 = ssub.s32 %s8, 1
      %s154 = smul.u32 %s17, 2
      %s155 = sadd.s32 %s154, %s18
      %p156 = scmp.lt.s32.totalorder %s155, 1
      %s157 = scalar_select %p156, %s155, 1
      %s158 = smul.addr %s157, 8
      %s159 = scalar_lea.vmem %s0, %s158
      %p160 = pneg %p50
      %p161 = pneg %p47
      %s162 = smul.u32 %s17, 2
      %s163 = sadd.s32 %s162, %s18
      %p164 = scmp.lt.s32.totalorder %s163, 1
      %s165 = scalar_select %p164, %s163, 1
      %s166 = smul.addr %s165, 8
      %s167 = scalar_lea.vmem %s1, %s166
      %p168 = pneg %p80
      %p169 = pneg %p77
      %p170 = pneg %p106
      %p171 = pneg %p103
      %p172 = scmp.lt.s32.totalorder %s17, 0
      %s173 = scalar_select %p172, %s17, 0
      %s174 = smul.addr %s173, 8
      %s175 = scalar_lea.vmem %s2, %s174
      %s176 = smul.u32 %s17, 2
      %s177 = sadd.s32 %s176, %s18
      %p178 = scmp.lt.s32.totalorder %s177, 1
      %s179 = scalar_select %p178, %s177, 1
      %s180 = smul.addr %s179, 8
      %s181 = scalar_lea.vmem %s0, %s180
      %s182 = smul.u32 %s17, 2
      %s183 = sadd.s32 %s182, %s18
      %s184 = smul.u32 %s17, 2
      %s185 = sadd.s32 %s184, %s18
      %p186 = scmp.lt.s32.totalorder %s185, 1
      %s187 = scalar_select %p186, %s185, 1
      %s188 = smul.addr %s187, 8
      %s189 = scalar_lea.vmem %s1, %s188
      %s190 = smul.u32 %s17, 2
      %s191 = sadd.s32 %s190, %s18
      %p192 = scmp.lt.s32.totalorder %s17, 0
      %s193 = scalar_select %p192, %s17, 0
      %s194 = smul.addr %s193, 8
      %s195 = scalar_lea.vmem %s2, %s194
      %p196 = scmp.eq.s32.totalorder %s18, 0
      // Predicated region
      $region29: #{yolo_head_forward.5} parent=27 // pred_check
        %p197 = pneg %p196
      $region30: #{yolo_head_forward.5} parent=27 // pred_check_branch
        %199 = sbr.rel (%p197) target = $region32
      $region31: #{yolo_head_forward.5} parent=27 // pred_region
        %200 = vst [vmem:[#allocation2] sm:$0xff] 0.0
      $region32: #{yolo_head_forward.5} parent=27 // pred_fallthru
        _
      %v201 = vld [vmem:[%s181] sm:$0xff]
      %v202 = vld [vmem:[%s189] sm:$0xff]
      %v203 = vmax.f32 %v201, 0.0
      %v204 = vmul.f32 %v201, %v202
      %v205 = vsub.f32 %v203, %v204
      %v206 = vand.u32 2147483647, %v201
      %v207 = vsub.f32 0.0, %v206
      %v208 = vmul.f32 %v207, 1.442695
      %v209 = vpow.pop %v208
      %v210 = vadd.f32 %v209, 1.0
      %v211 = vlog2.pop %v210
      %v212 = vmul.f32 %v211, 0.6931472
      %v213 = vadd.f32 %v205, %v212
      %s214 = smul.u32 %s17, 2
      %s215 = sadd.s32 %s214, %s18
      %s216 = smul.u32 %s215, 8
      %v217 = vlaneseq
      %v218 = vshrl.u32 %v217, 7
      %v219 = vstv %s216
      %v220 = vadd.s32 %v219, %v218
      %vm221 = vcmp.lt.s32.totalorder %v220, 12
      %v222 = vsel %vm221, %v213, 0.0
      %v223 = vld [vmem:[#allocation2] sm:$0xff]
      %v224 = vadd.f32 %v222, 0.0
      %v225 = vadd.f32 %v223, %v224
      %226 = vst [vmem:[#allocation2] sm:$0xff] %v225
      %p227 = scmp.eq.s32.totalorder %s18, 1
      // Predicated region
      $region33: #{yolo_head_forward.5} parent=27 // pred_check
        %p228 = pneg %p227
      $region34: #{yolo_head_forward.5} parent=27 // pred_check_branch
        %230 = sbr.rel (%p228) target = $region36
      $region35: #{yolo_head_forward.5} parent=27 // pred_region
        %v231 = vld [vmem:[#allocation2] sm:$0xff]
        %232 = vst [vmem:[%s195] sm:$0xff] %v231
      $region36: #{yolo_head_forward.5} parent=27 // pred_fallthru
        _
      %p233 = scmp.lt.s32.totalorder %s17, 0
      %s234 = scalar_select %p233, %s17, 0
      %s235 = smul.addr %s234, 8
      %s236 = scalar_lea.vmem %s2, %s235
      // Predicated region
      $region37: #{yolo_head_forward.5} parent=27 // pred_check
        %p237 = pneg %p103
      $region38: #{yolo_head_forward.5} parent=27 // pred_check_branch
        %239 = sbr.rel (%p237) target = $region40
      $region39: #{yolo_head_forward.5} parent=27 // pred_region
        _
      $region40: #{yolo_head_forward.5} parent=27 // pred_fallthru
        _
      // Predicated region
      $region41: #{yolo_head_forward.5} parent=27 // pred_check
        %p240 = pneg %p103
      $region42: #{yolo_head_forward.5} parent=27 // pred_check_branch
        %242 = sbr.rel (%p240) target = $region44
      $region43: #{yolo_head_forward.5} parent=27 // pred_region
        %p243 = scmp.lt.s32.totalorder %s17, 0
        %s244 = scalar_select %p243, %s17, 0
        %s245 = smul.addr %s244, 8
        %s246 = scalar_lea.vmem %s2, %s245
      $region44: #{yolo_head_forward.5} parent=27 // pred_fallthru
        _
    $region28: #{yolo_head_forward.5} parent=5 // pred_fallthru
      _
    %p247 = scmp.le.s32.totalorder 2, %s8
    // Predicated region
    $region45: #{yolo_head_forward.5} parent=5 // pred_check
      %p248 = pneg %p247
    $region46: #{yolo_head_forward.5} parent=5 // pred_check_branch
      %250 = sbr.rel (%p248) target = $region48
    $region47: #{yolo_head_forward.5} parent=5 // pred_region
      %s251 = ssub.s32 %s8, 2
    $region48: #{yolo_head_forward.5} parent=5 // pred_fallthru
      _
  $region6: #{yolo_head_forward.5} parent=0 // loop_footer
    %s12 = sadd.s32 1, %s8
  $region7: #{yolo_head_forward.5} parent=0 // loop_footer_branch
    %7 = sbr.rel target = $region3
  $region8: #{yolo_head_forward.5} parent=0 // loop_exit
    _

</llo_original>
